<compile_context>
chip_gen: v7x
topology: tpu7x:2x2x1
jax: 0.10.0
libtpu: 0.0.40
codegen_flags: <defaults>
</compile_context>

<pallas_src>
import jax
import jax.numpy as jnp
from jax.experimental import pallas as pl
from jax.experimental.pallas import tpu as pltpu


def _broadcast_kernel(w_ref, o_ref):
    # w_ref: (1, CCP) resident weights slab; o_ref: (TB, CCP) lane-dense tile.
    o_ref[...] = jnp.broadcast_to(w_ref[...], o_ref.shape)


def _pick_tb(batches, ccp, itemsize):
    """Rows of the output written per grid step (~1 MiB tile, sublane-aligned)."""
    target_bytes = 1 << 20  # ~1 MiB output tile: >=85% of HBM roofline per ref data
    rows = max(1, target_bytes // (ccp * itemsize))
    if rows >= batches:
        return batches  # single full block; block dim == full array dim -> layout OK
    tb = max(8, (rows // 8) * 8)  # multiple of 8 sublanes (f32)
    return min(tb, batches)


def sum_forward(weights, logp):
    """Pallas equivalent of Sum.forward.

    weights: (components, components, partitions)
    logp:    (batch, ..., last_dim) — only shapes are used (matches PyTorch).
    returns: (batch, components, components, partitions//last_dim, last_dim)
    """
    components = weights.shape[0]
    partitions = weights.shape[-1]
    last_dim = logp.shape[-1]
    batches = logp.shape[0]
    assert partitions % last_dim == 0, "partitions must be divisible by logp.shape[-1]"
    r = partitions // last_dim

    ccp = components * components * partitions
    itemsize = jnp.dtype(weights.dtype).itemsize

    # Lane-dense slab: (1, C*C*P); last dim is the full (large) array dim.
    w2d = weights.reshape(1, ccp)

    tb = _pick_tb(batches, ccp, itemsize)
    grid = (pl.cdiv(batches, tb),)

    out_bytes = batches * ccp * itemsize
    w_bytes = ccp * itemsize

    # Double-buffered output tile + double-buffered weights slab, 2x headroom,
    # clamped to [4 MiB, 32 MiB] (safe on v5e/v6e/v7x scoped-VMEM limits).
    vmem_needed = 2 * (tb * ccp + ccp) * itemsize
    vmem_limit = int(min(max(2 * vmem_needed, 4 << 20), 32 << 20))

    out2d = pl.pallas_call(
        _broadcast_kernel,
        out_shape=jax.ShapeDtypeStruct((batches, ccp), weights.dtype),
        grid_spec=pltpu.PrefetchScalarGridSpec(
            num_scalar_prefetch=0,
            grid=grid,
            in_specs=[
                # Constant index_map -> weights slab fetched once, stays resident.
                pl.BlockSpec((1, ccp), lambda b: (0, 0)),
            ],
            out_specs=pl.BlockSpec((tb, ccp), lambda b: (b, 0)),
        ),
        compiler_params=pltpu.CompilerParams(
            dimension_semantics=("parallel",),  # shards across TCs on v7x; no-op on v5e/v6e
            vmem_limit_bytes=vmem_limit,
        ),
        cost_estimate=pl.CostEstimate(
            flops=0, transcendentals=0, bytes_accessed=out_bytes + w_bytes
        ),
    )(w2d)

    # Free metadata reshape back to the module's 5-D output layout.
    return out2d.reshape(batches, components, components, r, last_dim)


if __name__ == "__main__":
    # Deterministic synthetic setup (mirrors torch.rand init in __init__).
    components = 4
    partitions = 16
    batch = 2
    last_dim = 8  # r = partitions // last_dim = 2

    key = jax.random.PRNGKey(0)
    kw, kx = jax.random.split(key)
    weights = jax.random.uniform(kw, (components, components, partitions), dtype=jnp.float32)
    logp = jax.random.normal(kx, (batch, components, last_dim), dtype=jnp.float32)

    out = sum_forward(weights, logp)
    out = jax.block_until_ready(out)

    # Reference check (pure JAX): rearrange + repeat over batch.
    ref = jnp.broadcast_to(
        weights.reshape(components, components, partitions // last_dim, last_dim)[None],
        (batch, components, components, partitions // last_dim, last_dim),
    )
    assert out.shape == (batch, components, components, partitions // last_dim, last_dim)
    assert jnp.allclose(out, ref), "mismatch vs reference"

    print("KERNEL_OK")
</pallas_src>

<mosaic_0001>
module attributes {stable_mosaic.version = 11 : i64} {
  func.func @_broadcast_kernel(%arg0: i32, %arg1: memref<1x256xf32, #tpu.memory_space<vmem>>, %arg2: memref<2x256xf32, #tpu.memory_space<vmem>>) attributes {dimension_semantics = [#tpu.dimension_semantics<parallel>], iteration_bounds = array<i64: 1>, scalar_prefetch = 0 : i64, scratch_operands = 0 : i64, tpu.core_type = #tpu.core_type<tc>, window_params = [{pipeline_mode = #tpu.pipeline_mode<synchronous>, transform_indices = @transform_0, window_bounds = array<i64: 1, 256>}, {transform_indices = @transform_1, window_bounds = array<i64: 2, 256>}]} {
    %c0 = arith.constant 0 : index
    %c0_0 = arith.constant 0 : index
    %0 = vector.load %arg1[%c0, %c0_0] : memref<1x256xf32, #tpu.memory_space<vmem>>, vector<1x256xf32>
    %1 = vector.shape_cast %0 : vector<1x256xf32> to vector<1x256xf32>
    %2 = vector.broadcast %1 : vector<1x256xf32> to vector<2x256xf32>
    %c0_1 = arith.constant 0 : index
    %c0_2 = arith.constant 0 : index
    %3 = vector.load %arg2[%c0_1, %c0_2] : memref<2x256xf32, #tpu.memory_space<vmem>>, vector<2x256xf32>
    tpu.vector_store %arg2[%c0_1, %c0_2], %2 {strides = array<i32>} : memref<2x256xf32, #tpu.memory_space<vmem>>, vector<2x256xf32>,
    return
  }
  func.func @transform_0(%arg0: i32) -> (i32, i32) {
    %c0_i32 = arith.constant 0 : i32
    %c0_i32_0 = arith.constant 0 : i32
    %c0_i32_1 = arith.constant 0 : i32
    return %c0_i32, %c0_i32_0 : i32, i32
  }
  func.func @transform_1(%arg0: i32) -> (i32, i32) {
    %c0_i32 = arith.constant 0 : i32
    %c0_i32_0 = arith.constant 0 : i32
    return %arg0, %c0_i32 : i32, i32
  }
}

</mosaic_0001>

<llo_original>
// kernel: tpu_custom_call.1
$region0: #{tpu_custom_call.1}
  #allocation0 [shape = 'u32[]', space=smem, size = 0x4, offset = 0x4, fixed_abs, tag = 'smem constant byte address 0x4 - core index']
  #allocation1 [shape = 'u32[144,128]{1,0:T(1,128)}', space=vmem, size = 0x12000, scoped, tag = 'internal scratch']
  %s0 = inlined_call_operand.hbm [shape: f32[1,256], index: 0, kind: input, shape index: {}]
  %s1 = inlined_call_operand.hbm [shape: f32[2,256], index: 1, kind: output, shape index: {}]
  %s2 = sld [smem:[#allocation0]]
  $region18: #{tpu_custom_call.1} parent=0
    _
  %s4 = ssub.s32 1, %s2
  %s5 = scalar_select 0, %s4, %s2
  $region1: #{tpu_custom_call.1} parent=0
    #allocation2 [shape = 'u8[1024]{0}', space=vmem, size = 0x400, scoped, tag = 'input window, operand 0, single buffered']
    #allocation3 [shape = 's32[1]{0}', space=sflag, size = 0x4, scoped, tag = 'scoped memory for tpu_custom_call.1']
    #allocation4 [shape = 's32[1]{0}', space=sflag, size = 0x4, scoped, tag = 'scoped memory for tpu_custom_call.1']
    #allocation5 [shape = 'u8[2048]{0}', space=vmem, size = 0x800, scoped, tag = 'output window, operand 0, single buffered']
    %6 = vsyncpa [#allocation3], 0
    %7 = vsyncpa [#allocation4], 0
    // Predicated region
    $region2: #{tpu_custom_call.1} parent=1 // pred_check
      _
    $region3: #{tpu_custom_call.1} parent=1 // pred_check_branch
      %9 = sbr.rel (0) target = $region5
    $region4: #{tpu_custom_call.1} parent=1 // pred_region
      %s11 = ssub.s32 32, 32
      %12 = vsyncadd [#allocation3], %s11
      %s14 = sshll.u32 [#allocation2], 4
      %s15 = int_to_ptr.vmem [resolvable:$true] %s14
      %17 = dma.hbm_to_vmem [thread:$0]  %s0, 32, %s15, [#allocation3]
    $region5: #{tpu_custom_call.1} parent=1 // pred_fallthru
      _
    // Predicated region
    $region6: #{tpu_custom_call.1} parent=1 // pred_check
      _
    $region7: #{tpu_custom_call.1} parent=1 // pred_check_branch
      %19 = sbr.rel (0) target = $region9
    $region8: #{tpu_custom_call.1} parent=1 // pred_region
      %20 = dma.done [#allocation3], 32
    $region9: #{tpu_custom_call.1} parent=1 // pred_fallthru
      _
    %v21 = vld [vmem:[#allocation2] sm:$0x3]
    %v23 = vlaneseq
    %v24 = vshrl.u32 %v23, 7
    %v25 = vsub.s32 0, %v24
    %v26 = vrot.slane %v21, %v25
    %v27 = vlaneseq
    %v28 = vshrl.u32 %v27, 7
    %v29 = vsub.s32 1, %v28
    %v30 = vrot.slane %v21, %v29
    %v31 = vcombine.low %v26, %v30
    %v33 = vunpack.c.l.s4 1983009808
    %v34 = vunpack.c.0.s8 %v33
    %v35 = vlaneseq
    %v36 = vshrl.u32 %v35, 7
    %v37 = vsub.s32 %v34, %v36
    %v38 = vrot.slane %v31, %v37
    %40 = vst [vmem:[#allocation5] sm:$0xf] %v38
    // Predicated region
    $region10: #{tpu_custom_call.1} parent=1 // pred_check
      _
    $region11: #{tpu_custom_call.1} parent=1 // pred_check_branch
      %42 = sbr.rel (0) target = $region13
    $region12: #{tpu_custom_call.1} parent=1 // pred_region
      %s44 = ssub.s32 64, 64
      %45 = vsyncadd [#allocation4], %s44
      %s47 = sshll.u32 [#allocation5], 4
      %s48 = int_to_ptr.vmem [resolvable:$true] %s47
      %50 = dma.vmem_to_hbm [thread:$0]  %s48, 64, %s1, [#allocation4]
    $region13: #{tpu_custom_call.1} parent=1 // pred_fallthru
      _
    // Predicated region
    $region14: #{tpu_custom_call.1} parent=1 // pred_check
      _
    $region15: #{tpu_custom_call.1} parent=1 // pred_check_branch
      %52 = sbr.rel (0) target = $region17
    $region16: #{tpu_custom_call.1} parent=1 // pred_region
      %53 = dma.done [#allocation4], 64
    $region17: #{tpu_custom_call.1} parent=1 // pred_fallthru
      _
    %54 = vsyncpa [#allocation3], 1
    %55 = vsyncpa [#allocation4], 1

</llo_original>
